<compile_context>
chip_gen: v7x
topology: tpu7x:2x2x1
jax: 0.10.0
libtpu: 0.0.40
codegen_flags: <defaults>
</compile_context>

<pallas_src>
import functools
import math

import jax
import jax.numpy as jnp
import numpy as np
from jax import lax
from jax.experimental import pallas as pl
from jax.experimental.pallas import tpu as pltpu

EPS = 1e-5
# dot_general dimension numbers contracting the last dim of both operands
# (i.e. a matmul with a transposed RHS, handled natively by the MXU).
DN_T = (((1,), (1,)), ((), ()))


def _bn_relu(h):
    """Training-mode BatchNorm1d(affine=False) followed by ReLU."""
    m = jnp.mean(h, axis=0, keepdims=True)
    v = jnp.mean((h - m) ** 2, axis=0, keepdims=True)
    return jnp.maximum((h - m) * jax.lax.rsqrt(v + EPS), 0.0)


def cdn_kernel(idx_ref, *refs, n_cross, emb_dims, n_dense):
    n_sparse = len(emb_dims)
    emb_refs = refs[:n_sparse]                     # small tables, VMEM-resident
    dense_ref = refs[n_sparse]                     # (B, n_dense) VMEM
    (cw_ref, cb_ref, w1_ref, b1_ref, w2_ref, b2_ref, woc_ref, wod_ref,
     out_ref, x_stage) = refs[n_sparse + 1:]

    B, F = x_stage.shape

    # ---- fused embedding & stacking layer: on-chip gather into VMEM ----
    # b, off, d are static (fully unrolled); only `row` is a dynamic SMEM scalar.
    off = 0
    for t, d in enumerate(emb_dims):
        for b in range(B):
            row = idx_ref[b, t]                    # dynamic scalar from SMEM
            x_stage[pl.ds(b, 1), pl.ds(off, d)] = emb_refs[t][pl.ds(row, 1), :]
        off += d
    x_stage[:, pl.ds(off, n_dense)] = dense_ref[...]

    # ---- stacking-layer batch norm (training-mode stats) ----
    x = x_stage[...]
    mu = jnp.mean(x, axis=0, keepdims=True)
    var = jnp.mean((x - mu) ** 2, axis=0, keepdims=True)
    x = (x - mu) * jax.lax.rsqrt(var + EPS)

    # ---- CrossNetwork: x_{l+1} = x_0 * <x_l, w_l> + b_l + x_l ----
    # Serial dependency chain: keep the dot on VPU+XLU (small B) instead of an
    # N=1 MXU dot_general, avoiding per-layer MXU push / result-FIFO latency.
    cw = cw_ref[...]                               # (n_cross, F)
    cb = cb_ref[...]                               # (n_cross, F)
    x0 = x
    xi = x
    for i in range(n_cross):
        s = jnp.sum(xi * cw[i:i + 1, :], axis=-1, keepdims=True)       # (B, 1)
        xi = x0 * s + cb[i:i + 1, :] + xi
    out_cross = xi                                 # (B, F)

    # ---- DeepNetwork: Linear -> BN -> ReLU, twice ----
    # TODO(synk): bf16 operands (f32 accumulation) once batch is non-trivial.
    h = jnp.dot(x, w1_ref[...], preferred_element_type=jnp.float32) + b1_ref[...]
    h = _bn_relu(h)
    h = jnp.dot(h, w2_ref[...], preferred_element_type=jnp.float32) + b2_ref[...]
    h = _bn_relu(h)                                # (B, H2)

    # ---- output layer (no bias) + sigmoid, produced lane-dense as (1, B) ----
    # concat([cross, deep]) @ W == cross @ W[:F] + deep @ W[F:]; computed with a
    # transposed contraction so the logit row is lane-major directly.
    logit = (lax.dot_general(woc_ref[...], out_cross, DN_T,
                             preferred_element_type=jnp.float32)
             + lax.dot_general(wod_ref[...], h, DN_T,
                               preferred_element_type=jnp.float32))    # (1, B)
    out_ref[...] = jax.nn.sigmoid(logit)


def cross_deep_network(sparse_feat, dense_feat, emb_tables, params, n_cross):
    """sparse_feat: (B, n_sparse) int, dense_feat: (B, n_dense) f32. Returns (B,) CTR."""
    B = sparse_feat.shape[0]
    cw, cb, w1, b1, w2, b2, wout = params
    F = cw.shape[1]
    H1, H2 = w1.shape[1], w2.shape[1]
    n_sparse = len(emb_tables)
    n_dense = dense_feat.shape[1]
    emb_dims = tuple(int(t.shape[1]) for t in emb_tables)

    # Split/reshape the output weights outside the kernel (free at trace time).
    woc = wout[:F, 0][None, :]                     # (1, F)
    wod = wout[F:, 0][None, :]                     # (1, H2)

    vmem = pl.BlockSpec(memory_space=pltpu.MemorySpace.VMEM)

    grid_spec = pltpu.PrefetchScalarGridSpec(
        num_scalar_prefetch=1,                     # sparse indices -> SMEM
        grid=(),
        in_specs=[vmem] * n_sparse + [vmem] + [vmem] * 8,
        out_specs=vmem,
        scratch_shapes=[
            pltpu.VMEM((B, F), jnp.float32),       # feature staging buffer
        ],
    )

    emb_elems = sum(int(t.shape[0]) * int(t.shape[1]) for t in emb_tables)
    flops = (2 * B * (F * H1 + H1 * H2)            # deep matmuls
             + n_cross * 5 * B * F                 # cross dots + updates
             + 2 * B * (F + H2))                   # output projection
    transcendentals = B + (F + H1 + H2)            # sigmoid + one rsqrt per BN column
    bytes_accessed = 4 * (B * n_sparse + emb_elems + B * n_dense
                          + 2 * n_cross * F
                          + F * H1 + H1 + H1 * H2 + H2 + (F + H2) + B)
    cost = pl.CostEstimate(flops=int(flops),
                           transcendentals=int(transcendentals),
                           bytes_accessed=int(bytes_accessed))

    out = pl.pallas_call(
        functools.partial(cdn_kernel, n_cross=n_cross, emb_dims=emb_dims,
                          n_dense=n_dense),
        out_shape=jax.ShapeDtypeStruct((1, B), jnp.float32),     # lane-dense
        grid_spec=grid_spec,
        cost_estimate=cost,
    )(sparse_feat.astype(jnp.int32), *emb_tables, dense_feat,
      cw, cb, w1, b1, w2, b2, woc, wod)
    return out[0]


# ---------------- pure-JAX reference (mirrors the PyTorch forward) ----------
def reference(sparse_feat, dense_feat, emb_tables, params, n_cross):
    cw, cb, w1, b1, w2, b2, wout = params
    emb = [jnp.take(t, sparse_feat[:, i], axis=0) for i, t in enumerate(emb_tables)]
    x = jnp.concatenate(emb + [dense_feat], axis=1).astype(jnp.float32)

    mu = jnp.mean(x, 0, keepdims=True)
    var = jnp.mean((x - mu) ** 2, 0, keepdims=True)
    x = (x - mu) / jnp.sqrt(var + EPS)

    x0 = x[:, :, None]
    xi = x0
    for i in range(n_cross):
        x0_xi = jnp.matmul(x0, jnp.swapaxes(xi, 1, 2))          # (B, F, F)
        x0_xi_w = jnp.matmul(x0_xi, cw[i])[:, :, None]          # (B, F, 1)
        xi = x0_xi_w + cb[i][:, None] + xi
    out_cross = xi[:, :, 0]

    def bn_relu(h):
        m = jnp.mean(h, 0, keepdims=True)
        v = jnp.mean((h - m) ** 2, 0, keepdims=True)
        return jnp.maximum((h - m) / jnp.sqrt(v + EPS), 0.0)

    h = bn_relu(x @ w1 + b1)
    h = bn_relu(h @ w2 + b2)
    final = jnp.concatenate([out_cross, h], axis=1)
    return jax.nn.sigmoid((final @ wout)[:, 0])


if __name__ == "__main__":
    key = jax.random.PRNGKey(0)

    # ---- module hyper-parameters (small but consistent with the module) ----
    sparse_cardinalities = [100, 50, 30]
    n_dense_feat = 5
    n_cross_layer = 2                      # CrossNetwork runs n_cross_layer + 1 iterations
    deep_layers = [32, 16]
    batch = 8

    emb_dims = [int(6 * math.pow(c, 0.25)) for c in sparse_cardinalities]
    n_input_feat = int(np.sum(emb_dims)) + n_dense_feat
    n_cross = n_cross_layer + 1
    last_dim = n_input_feat + deep_layers[-1]

    # ---- deterministic parameter init ----
    keys = jax.random.split(key, 16)
    emb_tables = [
        jax.random.normal(keys[i], (c, d), jnp.float32)
        for i, (c, d) in enumerate(zip(sparse_cardinalities, emb_dims))
    ]
    cw = jax.random.normal(keys[4], (n_cross, n_input_feat), jnp.float32)
    cb = jax.random.normal(keys[5], (n_cross, n_input_feat), jnp.float32)
    w1 = jax.random.normal(keys[6], (n_input_feat, deep_layers[0]), jnp.float32) * 0.1
    b1 = jax.random.normal(keys[7], (1, deep_layers[0]), jnp.float32) * 0.1
    w2 = jax.random.normal(keys[8], (deep_layers[0], deep_layers[1]), jnp.float32) * 0.1
    b2 = jax.random.normal(keys[9], (1, deep_layers[1]), jnp.float32) * 0.1
    wout = jax.random.normal(keys[10], (last_dim, 1), jnp.float32) * 0.1
    params = (cw, cb, w1, b1, w2, b2, wout)

    # ---- inputs ----
    sparse_feat = jnp.stack(
        [jax.random.randint(keys[11 + i], (batch,), 0, c)
         for i, c in enumerate(sparse_cardinalities)],
        axis=1,
    ).astype(jnp.int32)                                          # (B, n_sparse)
    dense_feat = jax.random.normal(keys[14], (batch, n_dense_feat), jnp.float32)

    # ---- run Pallas kernel (embedding gather fused on-chip) ----
    ctr = cross_deep_network(sparse_feat, dense_feat, emb_tables, params, n_cross)
    ctr = jax.block_until_ready(ctr)

    ref = reference(sparse_feat, dense_feat, emb_tables, params, n_cross)
    np.testing.assert_allclose(np.asarray(ctr), np.asarray(ref), rtol=2e-3, atol=2e-3)

    print("KERNEL_OK")
</pallas_src>

<mosaic_0001>
module attributes {stable_mosaic.version = 11 : i64} {
  func.func @cdn_kernel(%arg0: memref<8x3xi32, #tpu.memory_space<smem>>, %arg1: memref<100x18xf32, #tpu.memory_space<vmem>>, %arg2: memref<50x15xf32, #tpu.memory_space<vmem>>, %arg3: memref<30x14xf32, #tpu.memory_space<vmem>>, %arg4: memref<8x5xf32, #tpu.memory_space<vmem>>, %arg5: memref<3x52xf32, #tpu.memory_space<vmem>>, %arg6: memref<3x52xf32, #tpu.memory_space<vmem>>, %arg7: memref<52x32xf32, #tpu.memory_space<vmem>>, %arg8: memref<1x32xf32, #tpu.memory_space<vmem>>, %arg9: memref<32x16xf32, #tpu.memory_space<vmem>>, %arg10: memref<1x16xf32, #tpu.memory_space<vmem>>, %arg11: memref<1x52xf32, #tpu.memory_space<vmem>>, %arg12: memref<1x16xf32, #tpu.memory_space<vmem>>, %arg13: memref<1x8xf32, #tpu.memory_space<vmem>>, %arg14: memref<8x52xf32, #tpu.memory_space<vmem>>) attributes {dimension_semantics = [], scalar_prefetch = 1 : i64, scratch_operands = 1 : i64, tpu.core_type = #tpu.core_type<tc>} {
    %c0 = arith.constant 0 : index
    %c0_0 = arith.constant 0 : index
    %0 = memref.load %arg0[%c0, %c0_0] : memref<8x3xi32, #tpu.memory_space<smem>>
    %1 = arith.index_cast %0 : i32 to index
    %c0_1 = arith.constant 0 : index
    %2 = vector.load %arg1[%1, %c0_1] : memref<100x18xf32, #tpu.memory_space<vmem>>, vector<1x18xf32>
    %c0_2 = arith.constant 0 : index
    %c0_3 = arith.constant 0 : index
    %3 = vector.load %arg14[%c0_2, %c0_3] : memref<8x52xf32, #tpu.memory_space<vmem>>, vector<1x18xf32>
    tpu.vector_store %arg14[%c0_2, %c0_3], %2 {strides = array<i32>} : memref<8x52xf32, #tpu.memory_space<vmem>>, vector<1x18xf32>,
    %c1 = arith.constant 1 : index
    %c0_4 = arith.constant 0 : index
    %4 = memref.load %arg0[%c1, %c0_4] : memref<8x3xi32, #tpu.memory_space<smem>>
    %5 = arith.index_cast %4 : i32 to index
    %c0_5 = arith.constant 0 : index
    %6 = vector.load %arg1[%5, %c0_5] : memref<100x18xf32, #tpu.memory_space<vmem>>, vector<1x18xf32>
    %c1_6 = arith.constant 1 : index
    %c0_7 = arith.constant 0 : index
    %7 = vector.load %arg14[%c1_6, %c0_7] : memref<8x52xf32, #tpu.memory_space<vmem>>, vector<1x18xf32>
    tpu.vector_store %arg14[%c1_6, %c0_7], %6 {strides = array<i32>} : memref<8x52xf32, #tpu.memory_space<vmem>>, vector<1x18xf32>,
    %c2 = arith.constant 2 : index
    %c0_8 = arith.constant 0 : index
    %8 = memref.load %arg0[%c2, %c0_8] : memref<8x3xi32, #tpu.memory_space<smem>>
    %9 = arith.index_cast %8 : i32 to index
    %c0_9 = arith.constant 0 : index
    %10 = vector.load %arg1[%9, %c0_9] : memref<100x18xf32, #tpu.memory_space<vmem>>, vector<1x18xf32>
    %c2_10 = arith.constant 2 : index
    %c0_11 = arith.constant 0 : index
    %11 = vector.load %arg14[%c2_10, %c0_11] : memref<8x52xf32, #tpu.memory_space<vmem>>, vector<1x18xf32>
    tpu.vector_store %arg14[%c2_10, %c0_11], %10 {strides = array<i32>} : memref<8x52xf32, #tpu.memory_space<vmem>>, vector<1x18xf32>,
    %c3 = arith.constant 3 : index
    %c0_12 = arith.constant 0 : index
    %12 = memref.load %arg0[%c3, %c0_12] : memref<8x3xi32, #tpu.memory_space<smem>>
    %13 = arith.index_cast %12 : i32 to index
    %c0_13 = arith.constant 0 : index
    %14 = vector.load %arg1[%13, %c0_13] : memref<100x18xf32, #tpu.memory_space<vmem>>, vector<1x18xf32>
    %c3_14 = arith.constant 3 : index
    %c0_15 = arith.constant 0 : index
    %15 = vector.load %arg14[%c3_14, %c0_15] : memref<8x52xf32, #tpu.memory_space<vmem>>, vector<1x18xf32>
    tpu.vector_store %arg14[%c3_14, %c0_15], %14 {strides = array<i32>} : memref<8x52xf32, #tpu.memory_space<vmem>>, vector<1x18xf32>,
    %c4 = arith.constant 4 : index
    %c0_16 = arith.constant 0 : index
    %16 = memref.load %arg0[%c4, %c0_16] : memref<8x3xi32, #tpu.memory_space<smem>>
    %17 = arith.index_cast %16 : i32 to index
    %c0_17 = arith.constant 0 : index
    %18 = vector.load %arg1[%17, %c0_17] : memref<100x18xf32, #tpu.memory_space<vmem>>, vector<1x18xf32>
    %c4_18 = arith.constant 4 : index
    %c0_19 = arith.constant 0 : index
    %19 = vector.load %arg14[%c4_18, %c0_19] : memref<8x52xf32, #tpu.memory_space<vmem>>, vector<1x18xf32>
    tpu.vector_store %arg14[%c4_18, %c0_19], %18 {strides = array<i32>} : memref<8x52xf32, #tpu.memory_space<vmem>>, vector<1x18xf32>,
    %c5 = arith.constant 5 : index
    %c0_20 = arith.constant 0 : index
    %20 = memref.load %arg0[%c5, %c0_20] : memref<8x3xi32, #tpu.memory_space<smem>>
    %21 = arith.index_cast %20 : i32 to index
    %c0_21 = arith.constant 0 : index
    %22 = vector.load %arg1[%21, %c0_21] : memref<100x18xf32, #tpu.memory_space<vmem>>, vector<1x18xf32>
    %c5_22 = arith.constant 5 : index
    %c0_23 = arith.constant 0 : index
    %23 = vector.load %arg14[%c5_22, %c0_23] : memref<8x52xf32, #tpu.memory_space<vmem>>, vector<1x18xf32>
    tpu.vector_store %arg14[%c5_22, %c0_23], %22 {strides = array<i32>} : memref<8x52xf32, #tpu.memory_space<vmem>>, vector<1x18xf32>,
    %c6 = arith.constant 6 : index
    %c0_24 = arith.constant 0 : index
    %24 = memref.load %arg0[%c6, %c0_24] : memref<8x3xi32, #tpu.memory_space<smem>>
    %25 = arith.index_cast %24 : i32 to index
    %c0_25 = arith.constant 0 : index
    %26 = vector.load %arg1[%25, %c0_25] : memref<100x18xf32, #tpu.memory_space<vmem>>, vector<1x18xf32>
    %c6_26 = arith.constant 6 : index
    %c0_27 = arith.constant 0 : index
    %27 = vector.load %arg14[%c6_26, %c0_27] : memref<8x52xf32, #tpu.memory_space<vmem>>, vector<1x18xf32>
    tpu.vector_store %arg14[%c6_26, %c0_27], %26 {strides = array<i32>} : memref<8x52xf32, #tpu.memory_space<vmem>>, vector<1x18xf32>,
    %c7 = arith.constant 7 : index
    %c0_28 = arith.constant 0 : index
    %28 = memref.load %arg0[%c7, %c0_28] : memref<8x3xi32, #tpu.memory_space<smem>>
    %29 = arith.index_cast %28 : i32 to index
    %c0_29 = arith.constant 0 : index
    %30 = vector.load %arg1[%29, %c0_29] : memref<100x18xf32, #tpu.memory_space<vmem>>, vector<1x18xf32>
    %c7_30 = arith.constant 7 : index
    %c0_31 = arith.constant 0 : index
    %31 = vector.load %arg14[%c7_30, %c0_31] : memref<8x52xf32, #tpu.memory_space<vmem>>, vector<1x18xf32>
    tpu.vector_store %arg14[%c7_30, %c0_31], %30 {strides = array<i32>} : memref<8x52xf32, #tpu.memory_space<vmem>>, vector<1x18xf32>,
    %c0_32 = arith.constant 0 : index
    %c1_33 = arith.constant 1 : index
    %32 = memref.load %arg0[%c0_32, %c1_33] : memref<8x3xi32, #tpu.memory_space<smem>>
    %33 = arith.index_cast %32 : i32 to index
    %c0_34 = arith.constant 0 : index
    %34 = vector.load %arg2[%33, %c0_34] : memref<50x15xf32, #tpu.memory_space<vmem>>, vector<1x15xf32>
    %c0_35 = arith.constant 0 : index
    %c18 = arith.constant 18 : index
    %35 = vector.load %arg14[%c0_35, %c18] : memref<8x52xf32, #tpu.memory_space<vmem>>, vector<1x15xf32>
    tpu.vector_store %arg14[%c0_35, %c18], %34 {strides = array<i32>} : memref<8x52xf32, #tpu.memory_space<vmem>>, vector<1x15xf32>,
    %c1_36 = arith.constant 1 : index
    %c1_37 = arith.constant 1 : index
    %36 = memref.load %arg0[%c1_36, %c1_37] : memref<8x3xi32, #tpu.memory_space<smem>>
    %37 = arith.index_cast %36 : i32 to index
    %c0_38 = arith.constant 0 : index
    %38 = vector.load %arg2[%37, %c0_38] : memref<50x15xf32, #tpu.memory_space<vmem>>, vector<1x15xf32>
    %c1_39 = arith.constant 1 : index
    %c18_40 = arith.constant 18 : index
    %39 = vector.load %arg14[%c1_39, %c18_40] : memref<8x52xf32, #tpu.memory_space<vmem>>, vector<1x15xf32>
    tpu.vector_store %arg14[%c1_39, %c18_40], %38 {strides = array<i32>} : memref<8x52xf32, #tpu.memory_space<vmem>>, vector<1x15xf32>,
    %c2_41 = arith.constant 2 : index
    %c1_42 = arith.constant 1 : index
    %40 = memref.load %arg0[%c2_41, %c1_42] : memref<8x3xi32, #tpu.memory_space<smem>>
    %41 = arith.index_cast %40 : i32 to index
    %c0_43 = arith.constant 0 : index
    %42 = vector.load %arg2[%41, %c0_43] : memref<50x15xf32, #tpu.memory_space<vmem>>, vector<1x15xf32>
    %c2_44 = arith.constant 2 : index
    %c18_45 = arith.constant 18 : index
    %43 = vector.load %arg14[%c2_44, %c18_45] : memref<8x52xf32, #tpu.memory_space<vmem>>, vector<1x15xf32>
    tpu.vector_store %arg14[%c2_44, %c18_45], %42 {strides = array<i32>} : memref<8x52xf32, #tpu.memory_space<vmem>>, vector<1x15xf32>,
    %c3_46 = arith.constant 3 : index
    %c1_47 = arith.constant 1 : index
    %44 = memref.load %arg0[%c3_46, %c1_47] : memref<8x3xi32, #tpu.memory_space<smem>>
    %45 = arith.index_cast %44 : i32 to index
    %c0_48 = arith.constant 0 : index
    %46 = vector.load %arg2[%45, %c0_48] : memref<50x15xf32, #tpu.memory_space<vmem>>, vector<1x15xf32>
    %c3_49 = arith.constant 3 : index
    %c18_50 = arith.constant 18 : index
    %47 = vector.load %arg14[%c3_49, %c18_50] : memref<8x52xf32, #tpu.memory_space<vmem>>, vector<1x15xf32>
    tpu.vector_store %arg14[%c3_49, %c18_50], %46 {strides = array<i32>} : memref<8x52xf32, #tpu.memory_space<vmem>>, vector<1x15xf32>,
    %c4_51 = arith.constant 4 : index
    %c1_52 = arith.constant 1 : index
    %48 = memref.load %arg0[%c4_51, %c1_52] : memref<8x3xi32, #tpu.memory_space<smem>>
    %49 = arith.index_cast %48 : i32 to index
    %c0_53 = arith.constant 0 : index
    %50 = vector.load %arg2[%49, %c0_53] : memref<50x15xf32, #tpu.memory_space<vmem>>, vector<1x15xf32>
    %c4_54 = arith.constant 4 : index
    %c18_55 = arith.constant 18 : index
    %51 = vector.load %arg14[%c4_54, %c18_55] : memref<8x52xf32, #tpu.memory_space<vmem>>, vector<1x15xf32>
    tpu.vector_store %arg14[%c4_54, %c18_55], %50 {strides = array<i32>} : memref<8x52xf32, #tpu.memory_space<vmem>>, vector<1x15xf32>,
    %c5_56 = arith.constant 5 : index
    %c1_57 = arith.constant 1 : index
    %52 = memref.load %arg0[%c5_56, %c1_57] : memref<8x3xi32, #tpu.memory_space<smem>>
    %53 = arith.index_cast %52 : i32 to index
    %c0_58 = arith.constant 0 : index
    %54 = vector.load %arg2[%53, %c0_58] : memref<50x15xf32, #tpu.memory_space<vmem>>, vector<1x15xf32>
    %c5_59 = arith.constant 5 : index
    %c18_60 = arith.constant 18 : index
    %55 = vector.load %arg14[%c5_59, %c18_60] : memref<8x52xf32, #tpu.memory_space<vmem>>, vector<1x15xf32>
    tpu.vector_store %arg14[%c5_59, %c18_60], %54 {strides = array<i32>} : memref<8x52xf32, #tpu.memory_space<vmem>>, vector<1x15xf32>,
    %c6_61 = arith.constant 6 : index
    %c1_62 = arith.constant 1 : index
    %56 = memref.load %arg0[%c6_61, %c1_62] : memref<8x3xi32, #tpu.memory_space<smem>>
    %57 = arith.index_cast %56 : i32 to index
    %c0_63 = arith.constant 0 : index
    %58 = vector.load %arg2[%57, %c0_63] : memref<50x15xf32, #tpu.memory_space<vmem>>, vector<1x15xf32>
    %c6_64 = arith.constant 6 : index
    %c18_65 = arith.constant 18 : index
    %59 = vector.load %arg14[%c6_64, %c18_65] : memref<8x52xf32, #tpu.memory_space<vmem>>, vector<1x15xf32>
    tpu.vector_store %arg14[%c6_64, %c18_65], %58 {strides = array<i32>} : memref<8x52xf32, #tpu.memory_space<vmem>>, vector<1x15xf32>,
    %c7_66 = arith.constant 7 : index
    %c1_67 = arith.constant 1 : index
    %60 = memref.load %arg0[%c7_66, %c1_67] : memref<8x3xi32, #tpu.memory_space<smem>>
    %61 = arith.index_cast %60 : i32 to index
    %c0_68 = arith.constant 0 : index
    %62 = vector.load %arg2[%61, %c0_68] : memref<50x15xf32, #tpu.memory_space<vmem>>, vector<1x15xf32>
    %c7_69 = arith.constant 7 : index
    %c18_70 = arith.constant 18 : index
    %63 = vector.load %arg14[%c7_69, %c18_70] : memref<8x52xf32, #tpu.memory_space<vmem>>, vector<1x15xf32>
    tpu.vector_store %arg14[%c7_69, %c18_70], %62 {strides = array<i32>} : memref<8x52xf32, #tpu.memory_space<vmem>>, vector<1x15xf32>,
    %c0_71 = arith.constant 0 : index
    %c2_72 = arith.constant 2 : index
    %64 = memref.load %arg0[%c0_71, %c2_72] : memref<8x3xi32, #tpu.memory_space<smem>>
    %65 = arith.index_cast %64 : i32 to index
    %c0_73 = arith.constant 0 : index
    %66 = vector.load %arg3[%65, %c0_73] : memref<30x14xf32, #tpu.memory_space<vmem>>, vector<1x14xf32>
    %c0_74 = arith.constant 0 : index
    %c33 = arith.constant 33 : index
    %67 = vector.load %arg14[%c0_74, %c33] : memref<8x52xf32, #tpu.memory_space<vmem>>, vector<1x14xf32>
    tpu.vector_store %arg14[%c0_74, %c33], %66 {strides = array<i32>} : memref<8x52xf32, #tpu.memory_space<vmem>>, vector<1x14xf32>,
    %c1_75 = arith.constant 1 : index
    %c2_76 = arith.constant 2 : index
    %68 = memref.load %arg0[%c1_75, %c2_76] : memref<8x3xi32, #tpu.memory_space<smem>>
    %69 = arith.index_cast %68 : i32 to index
    %c0_77 = arith.constant 0 : index
    %70 = vector.load %arg3[%69, %c0_77] : memref<30x14xf32, #tpu.memory_space<vmem>>, vector<1x14xf32>
    %c1_78 = arith.constant 1 : index
    %c33_79 = arith.constant 33 : index
    %71 = vector.load %arg14[%c1_78, %c33_79] : memref<8x52xf32, #tpu.memory_space<vmem>>, vector<1x14xf32>
    tpu.vector_store %arg14[%c1_78, %c33_79], %70 {strides = array<i32>} : memref<8x52xf32, #tpu.memory_space<vmem>>, vector<1x14xf32>,
    %c2_80 = arith.constant 2 : index
    %c2_81 = arith.constant 2 : index
    %72 = memref.load %arg0[%c2_80, %c2_81] : memref<8x3xi32, #tpu.memory_space<smem>>
    %73 = arith.index_cast %72 : i32 to index
    %c0_82 = arith.constant 0 : index
    %74 = vector.load %arg3[%73, %c0_82] : memref<30x14xf32, #tpu.memory_space<vmem>>, vector<1x14xf32>
    %c2_83 = arith.constant 2 : index
    %c33_84 = arith.constant 33 : index
    %75 = vector.load %arg14[%c2_83, %c33_84] : memref<8x52xf32, #tpu.memory_space<vmem>>, vector<1x14xf32>
    tpu.vector_store %arg14[%c2_83, %c33_84], %74 {strides = array<i32>} : memref<8x52xf32, #tpu.memory_space<vmem>>, vector<1x14xf32>,
    %c3_85 = arith.constant 3 : index
    %c2_86 = arith.constant 2 : index
    %76 = memref.load %arg0[%c3_85, %c2_86] : memref<8x3xi32, #tpu.memory_space<smem>>
    %77 = arith.index_cast %76 : i32 to index
    %c0_87 = arith.constant 0 : index
    %78 = vector.load %arg3[%77, %c0_87] : memref<30x14xf32, #tpu.memory_space<vmem>>, vector<1x14xf32>
    %c3_88 = arith.constant 3 : index
    %c33_89 = arith.constant 33 : index
    %79 = vector.load %arg14[%c3_88, %c33_89] : memref<8x52xf32, #tpu.memory_space<vmem>>, vector<1x14xf32>
    tpu.vector_store %arg14[%c3_88, %c33_89], %78 {strides = array<i32>} : memref<8x52xf32, #tpu.memory_space<vmem>>, vector<1x14xf32>,
    %c4_90 = arith.constant 4 : index
    %c2_91 = arith.constant 2 : index
    %80 = memref.load %arg0[%c4_90, %c2_91] : memref<8x3xi32, #tpu.memory_space<smem>>
    %81 = arith.index_cast %80 : i32 to index
    %c0_92 = arith.constant 0 : index
    %82 = vector.load %arg3[%81, %c0_92] : memref<30x14xf32, #tpu.memory_space<vmem>>, vector<1x14xf32>
    %c4_93 = arith.constant 4 : index
    %c33_94 = arith.constant 33 : index
    %83 = vector.load %arg14[%c4_93, %c33_94] : memref<8x52xf32, #tpu.memory_space<vmem>>, vector<1x14xf32>
    tpu.vector_store %arg14[%c4_93, %c33_94], %82 {strides = array<i32>} : memref<8x52xf32, #tpu.memory_space<vmem>>, vector<1x14xf32>,
    %c5_95 = arith.constant 5 : index
    %c2_96 = arith.constant 2 : index
    %84 = memref.load %arg0[%c5_95, %c2_96] : memref<8x3xi32, #tpu.memory_space<smem>>
    %85 = arith.index_cast %84 : i32 to index
    %c0_97 = arith.constant 0 : index
    %86 = vector.load %arg3[%85, %c0_97] : memref<30x14xf32, #tpu.memory_space<vmem>>, vector<1x14xf32>
    %c5_98 = arith.constant 5 : index
    %c33_99 = arith.constant 33 : index
    %87 = vector.load %arg14[%c5_98, %c33_99] : memref<8x52xf32, #tpu.memory_space<vmem>>, vector<1x14xf32>
    tpu.vector_store %arg14[%c5_98, %c33_99], %86 {strides = array<i32>} : memref<8x52xf32, #tpu.memory_space<vmem>>, vector<1x14xf32>,
    %c6_100 = arith.constant 6 : index
    %c2_101 = arith.constant 2 : index
    %88 = memref.load %arg0[%c6_100, %c2_101] : memref<8x3xi32, #tpu.memory_space<smem>>
    %89 = arith.index_cast %88 : i32 to index
    %c0_102 = arith.constant 0 : index
    %90 = vector.load %arg3[%89, %c0_102] : memref<30x14xf32, #tpu.memory_space<vmem>>, vector<1x14xf32>
    %c6_103 = arith.constant 6 : index
    %c33_104 = arith.constant 33 : index
    %91 = vector.load %arg14[%c6_103, %c33_104] : memref<8x52xf32, #tpu.memory_space<vmem>>, vector<1x14xf32>
    tpu.vector_store %arg14[%c6_103, %c33_104], %90 {strides = array<i32>} : memref<8x52xf32, #tpu.memory_space<vmem>>, vector<1x14xf32>,
    %c7_105 = arith.constant 7 : index
    %c2_106 = arith.constant 2 : index
    %92 = memref.load %arg0[%c7_105, %c2_106] : memref<8x3xi32, #tpu.memory_space<smem>>
    %93 = arith.index_cast %92 : i32 to index
    %c0_107 = arith.constant 0 : index
    %94 = vector.load %arg3[%93, %c0_107] : memref<30x14xf32, #tpu.memory_space<vmem>>, vector<1x14xf32>
    %c7_108 = arith.constant 7 : index
    %c33_109 = arith.constant 33 : index
    %95 = vector.load %arg14[%c7_108, %c33_109] : memref<8x52xf32, #tpu.memory_space<vmem>>, vector<1x14xf32>
    tpu.vector_store %arg14[%c7_108, %c33_109], %94 {strides = array<i32>} : memref<8x52xf32, #tpu.memory_space<vmem>>, vector<1x14xf32>,
    %c0_110 = arith.constant 0 : index
    %c0_111 = arith.constant 0 : index
    %96 = vector.load %arg4[%c0_110, %c0_111] : memref<8x5xf32, #tpu.memory_space<vmem>>, vector<8x5xf32>
    %c0_112 = arith.constant 0 : index
    %c47 = arith.constant 47 : index
    %97 = vector.load %arg14[%c0_112, %c47] : memref<8x52xf32, #tpu.memory_space<vmem>>, vector<8x5xf32>
    tpu.vector_store %arg14[%c0_112, %c47], %96 {strides = array<i32>} : memref<8x52xf32, #tpu.memory_space<vmem>>, vector<8x5xf32>,
    %c0_113 = arith.constant 0 : index
    %c0_114 = arith.constant 0 : index
    %98 = vector.load %arg14[%c0_113, %c0_114] : memref<8x52xf32, #tpu.memory_space<vmem>>, vector<8x52xf32>
    %cst = arith.constant dense<0.000000e+00> : vector<52xf32>
    %99 = vector.multi_reduction <add>, %98, %cst [0] : vector<8x52xf32> to vector<52xf32>
    %100 = vector.shape_cast %99 : vector<52xf32> to vector<1x52xf32>
    %cst_115 = arith.constant 8.000000e+00 : f32
    %101 = vector.broadcast %cst_115 : f32 to vector<1x52xf32>
    %102 = arith.divf %100, %101 : vector<1x52xf32>
    %103 = vector.broadcast %102 : vector<1x52xf32> to vector<8x52xf32>
    %104 = arith.subf %98, %103 : vector<8x52xf32>
    %105 = arith.mulf %104, %104 : vector<8x52xf32>
    %cst_116 = arith.constant dense<0.000000e+00> : vector<52xf32>
    %106 = vector.multi_reduction <add>, %105, %cst_116 [0] : vector<8x52xf32> to vector<52xf32>
    %107 = vector.shape_cast %106 : vector<52xf32> to vector<1x52xf32>
    %cst_117 = arith.constant 8.000000e+00 : f32
    %108 = vector.broadcast %cst_117 : f32 to vector<1x52xf32>
    %109 = arith.divf %107, %108 : vector<1x52xf32>
    %110 = vector.broadcast %102 : vector<1x52xf32> to vector<8x52xf32>
    %111 = arith.subf %98, %110 : vector<8x52xf32>
    %cst_118 = arith.constant 9.99999974E-6 : f32
    %112 = vector.broadcast %cst_118 : f32 to vector<1x52xf32>
    %113 = arith.addf %109, %112 : vector<1x52xf32>
    %114 = math.rsqrt %113 : vector<1x52xf32>
    %115 = vector.broadcast %114 : vector<1x52xf32> to vector<8x52xf32>
    %116 = arith.mulf %111, %115 : vector<8x52xf32>
    %c0_119 = arith.constant 0 : index
    %c0_120 = arith.constant 0 : index
    %117 = vector.load %arg5[%c0_119, %c0_120] : memref<3x52xf32, #tpu.memory_space<vmem>>, vector<3x52xf32>
    %c0_121 = arith.constant 0 : index
    %c0_122 = arith.constant 0 : index
    %118 = vector.load %arg6[%c0_121, %c0_122] : memref<3x52xf32, #tpu.memory_space<vmem>>, vector<3x52xf32>
    %119 = vector.extract_strided_slice %117 {offsets = [0, 0], sizes = [1, 52], strides = [1, 1]} : vector<3x52xf32> to vector<1x52xf32>
    %120 = vector.broadcast %119 : vector<1x52xf32> to vector<8x52xf32>
    %121 = arith.mulf %116, %120 : vector<8x52xf32>
    %cst_123 = arith.constant dense<0.000000e+00> : vector<8xf32>
    %122 = vector.multi_reduction <add>, %121, %cst_123 [1] : vector<8x52xf32> to vector<8xf32>
    %123 = vector.shape_cast %122 : vector<8xf32> to vector<8x1xf32>
    %124 = vector.broadcast %123 : vector<8x1xf32> to vector<8x52xf32>
    %125 = arith.mulf %116, %124 : vector<8x52xf32>
    %126 = vector.extract_strided_slice %118 {offsets = [0, 0], sizes = [1, 52], strides = [1, 1]} : vector<3x52xf32> to vector<1x52xf32>
    %127 = vector.broadcast %126 : vector<1x52xf32> to vector<8x52xf32>
    %128 = arith.addf %125, %127 : vector<8x52xf32>
    %129 = arith.addf %128, %116 : vector<8x52xf32>
    %130 = vector.extract_strided_slice %117 {offsets = [1, 0], sizes = [1, 52], strides = [1, 1]} : vector<3x52xf32> to vector<1x52xf32>
    %131 = vector.broadcast %130 : vector<1x52xf32> to vector<8x52xf32>
    %132 = arith.mulf %129, %131 : vector<8x52xf32>
    %cst_124 = arith.constant dense<0.000000e+00> : vector<8xf32>
    %133 = vector.multi_reduction <add>, %132, %cst_124 [1] : vector<8x52xf32> to vector<8xf32>
    %134 = vector.shape_cast %133 : vector<8xf32> to vector<8x1xf32>
    %135 = vector.broadcast %134 : vector<8x1xf32> to vector<8x52xf32>
    %136 = arith.mulf %116, %135 : vector<8x52xf32>
    %137 = vector.extract_strided_slice %118 {offsets = [1, 0], sizes = [1, 52], strides = [1, 1]} : vector<3x52xf32> to vector<1x52xf32>
    %138 = vector.broadcast %137 : vector<1x52xf32> to vector<8x52xf32>
    %139 = arith.addf %136, %138 : vector<8x52xf32>
    %140 = arith.addf %139, %129 : vector<8x52xf32>
    %141 = vector.extract_strided_slice %117 {offsets = [2, 0], sizes = [1, 52], strides = [1, 1]} : vector<3x52xf32> to vector<1x52xf32>
    %142 = vector.broadcast %141 : vector<1x52xf32> to vector<8x52xf32>
    %143 = arith.mulf %140, %142 : vector<8x52xf32>
    %cst_125 = arith.constant dense<0.000000e+00> : vector<8xf32>
    %144 = vector.multi_reduction <add>, %143, %cst_125 [1] : vector<8x52xf32> to vector<8xf32>
    %145 = vector.shape_cast %144 : vector<8xf32> to vector<8x1xf32>
    %146 = vector.broadcast %145 : vector<8x1xf32> to vector<8x52xf32>
    %147 = arith.mulf %116, %146 : vector<8x52xf32>
    %148 = vector.extract_strided_slice %118 {offsets = [2, 0], sizes = [1, 52], strides = [1, 1]} : vector<3x52xf32> to vector<1x52xf32>
    %149 = vector.broadcast %148 : vector<1x52xf32> to vector<8x52xf32>
    %150 = arith.addf %147, %149 : vector<8x52xf32>
    %151 = arith.addf %150, %140 : vector<8x52xf32>
    %c0_126 = arith.constant 0 : index
    %c0_127 = arith.constant 0 : index
    %152 = vector.load %arg7[%c0_126, %c0_127] : memref<52x32xf32, #tpu.memory_space<vmem>>, vector<52x32xf32>
    %cst_128 = arith.constant dense<0.000000e+00> : vector<8x32xf32>
    %153 = tpu.matmul %116, %152, %cst_128 {dimension_numbers = #tpu.dot_dimension_numbers<[1], [0], [0], [1], [0, 0, 1, 1], [], []>} : vector<8x52xf32>, vector<52x32xf32>, vector<8x32xf32> -> vector<8x32xf32>
    %c0_129 = arith.constant 0 : index
    %c0_130 = arith.constant 0 : index
    %154 = vector.load %arg8[%c0_129, %c0_130] : memref<1x32xf32, #tpu.memory_space<vmem>>, vector<1x32xf32>
    %155 = vector.broadcast %154 : vector<1x32xf32> to vector<8x32xf32>
    %156 = arith.addf %153, %155 : vector<8x32xf32>
    %cst_131 = arith.constant dense<0.000000e+00> : vector<32xf32>
    %157 = vector.multi_reduction <add>, %156, %cst_131 [0] : vector<8x32xf32> to vector<32xf32>
    %158 = vector.shape_cast %157 : vector<32xf32> to vector<1x32xf32>
    %cst_132 = arith.constant 8.000000e+00 : f32
    %159 = vector.broadcast %cst_132 : f32 to vector<1x32xf32>
    %160 = arith.divf %158, %159 : vector<1x32xf32>
    %161 = vector.broadcast %160 : vector<1x32xf32> to vector<8x32xf32>
    %162 = arith.subf %156, %161 : vector<8x32xf32>
    %163 = arith.mulf %162, %162 : vector<8x32xf32>
    %cst_133 = arith.constant dense<0.000000e+00> : vector<32xf32>
    %164 = vector.multi_reduction <add>, %163, %cst_133 [0] : vector<8x32xf32> to vector<32xf32>
    %165 = vector.shape_cast %164 : vector<32xf32> to vector<1x32xf32>
    %cst_134 = arith.constant 8.000000e+00 : f32
    %166 = vector.broadcast %cst_134 : f32 to vector<1x32xf32>
    %167 = arith.divf %165, %166 : vector<1x32xf32>
    %168 = vector.broadcast %160 : vector<1x32xf32> to vector<8x32xf32>
    %169 = arith.subf %156, %168 : vector<8x32xf32>
    %cst_135 = arith.constant 9.99999974E-6 : f32
    %170 = vector.broadcast %cst_135 : f32 to vector<1x32xf32>
    %171 = arith.addf %167, %170 : vector<1x32xf32>
    %172 = math.rsqrt %171 : vector<1x32xf32>
    %173 = vector.broadcast %172 : vector<1x32xf32> to vector<8x32xf32>
    %174 = arith.mulf %169, %173 : vector<8x32xf32>
    %cst_136 = arith.constant 0.000000e+00 : f32
    %175 = vector.broadcast %cst_136 : f32 to vector<8x32xf32>
    %176 = arith.maximumf %174, %175 : vector<8x32xf32>
    %c0_137 = arith.constant 0 : index
    %c0_138 = arith.constant 0 : index
    %177 = vector.load %arg9[%c0_137, %c0_138] : memref<32x16xf32, #tpu.memory_space<vmem>>, vector<32x16xf32>
    %cst_139 = arith.constant dense<0.000000e+00> : vector<8x16xf32>
    %178 = tpu.matmul %176, %177, %cst_139 {dimension_numbers = #tpu.dot_dimension_numbers<[1], [0], [0], [1], [0, 0, 1, 1], [], []>} : vector<8x32xf32>, vector<32x16xf32>, vector<8x16xf32> -> vector<8x16xf32>
    %c0_140 = arith.constant 0 : index
    %c0_141 = arith.constant 0 : index
    %179 = vector.load %arg10[%c0_140, %c0_141] : memref<1x16xf32, #tpu.memory_space<vmem>>, vector<1x16xf32>
    %180 = vector.broadcast %179 : vector<1x16xf32> to vector<8x16xf32>
    %181 = arith.addf %178, %180 : vector<8x16xf32>
    %cst_142 = arith.constant dense<0.000000e+00> : vector<16xf32>
    %182 = vector.multi_reduction <add>, %181, %cst_142 [0] : vector<8x16xf32> to vector<16xf32>
    %183 = vector.shape_cast %182 : vector<16xf32> to vector<1x16xf32>
    %cst_143 = arith.constant 8.000000e+00 : f32
    %184 = vector.broadcast %cst_143 : f32 to vector<1x16xf32>
    %185 = arith.divf %183, %184 : vector<1x16xf32>
    %186 = vector.broadcast %185 : vector<1x16xf32> to vector<8x16xf32>
    %187 = arith.subf %181, %186 : vector<8x16xf32>
    %188 = arith.mulf %187, %187 : vector<8x16xf32>
    %cst_144 = arith.constant dense<0.000000e+00> : vector<16xf32>
    %189 = vector.multi_reduction <add>, %188, %cst_144 [0] : vector<8x16xf32> to vector<16xf32>
    %190 = vector.shape_cast %189 : vector<16xf32> to vector<1x16xf32>
    %cst_145 = arith.constant 8.000000e+00 : f32
    %191 = vector.broadcast %cst_145 : f32 to vector<1x16xf32>
    %192 = arith.divf %190, %191 : vector<1x16xf32>
    %193 = vector.broadcast %185 : vector<1x16xf32> to vector<8x16xf32>
    %194 = arith.subf %181, %193 : vector<8x16xf32>
    %cst_146 = arith.constant 9.99999974E-6 : f32
    %195 = vector.broadcast %cst_146 : f32 to vector<1x16xf32>
    %196 = arith.addf %192, %195 : vector<1x16xf32>
    %197 = math.rsqrt %196 : vector<1x16xf32>
    %198 = vector.broadcast %197 : vector<1x16xf32> to vector<8x16xf32>
    %199 = arith.mulf %194, %198 : vector<8x16xf32>
    %cst_147 = arith.constant 0.000000e+00 : f32
    %200 = vector.broadcast %cst_147 : f32 to vector<8x16xf32>
    %201 = arith.maximumf %199, %200 : vector<8x16xf32>
    %c0_148 = arith.constant 0 : index
    %c0_149 = arith.constant 0 : index
    %202 = vector.load %arg11[%c0_148, %c0_149] : memref<1x52xf32, #tpu.memory_space<vmem>>, vector<1x52xf32>
    %cst_150 = arith.constant dense<0.000000e+00> : vector<1x8xf32>
    %203 = tpu.matmul %202, %151, %cst_150 {dimension_numbers = #tpu.dot_dimension_numbers<[1], [1], [0], [0], [0, 0, 1, 0], [], []>} : vector<1x52xf32>, vector<8x52xf32>, vector<1x8xf32> -> vector<1x8xf32>
    %c0_151 = arith.constant 0 : index
    %c0_152 = arith.constant 0 : index
    %204 = vector.load %arg12[%c0_151, %c0_152] : memref<1x16xf32, #tpu.memory_space<vmem>>, vector<1x16xf32>
    %cst_153 = arith.constant dense<0.000000e+00> : vector<1x8xf32>
    %205 = tpu.matmul %204, %201, %cst_153 {dimension_numbers = #tpu.dot_dimension_numbers<[1], [1], [0], [0], [0, 0, 1, 0], [], []>} : vector<1x16xf32>, vector<8x16xf32>, vector<1x8xf32> -> vector<1x8xf32>
    %206 = arith.addf %203, %205 : vector<1x8xf32>
    %207 = arith.negf %206 : vector<1x8xf32>
    %208 = math.exp %207 : vector<1x8xf32>
    %cst_154 = arith.constant 1.000000e+00 : f32
    %209 = vector.broadcast %cst_154 : f32 to vector<1x8xf32>
    %210 = arith.addf %209, %208 : vector<1x8xf32>
    %211 = arith.divf %209, %210 : vector<1x8xf32>
    %c0_155 = arith.constant 0 : index
    %c0_156 = arith.constant 0 : index
    %212 = vector.load %arg13[%c0_155, %c0_156] : memref<1x8xf32, #tpu.memory_space<vmem>>, vector<1x8xf32>
    tpu.vector_store %arg13[%c0_155, %c0_156], %211 {strides = array<i32>} : memref<1x8xf32, #tpu.memory_space<vmem>>, vector<1x8xf32>,
    return
  }
}

</mosaic_0001>

<llo_original>
// kernel: tpu_custom_call.1
$region0: #{tpu_custom_call.1}
  #allocation0 [shape = 'u32[]', space=smem, size = 0x4, offset = 0x4, fixed_abs, tag = 'smem constant byte address 0x4 - core index']
  #allocation1 [shape = 'u32[144,128]{1,0:T(1,128)}', space=vmem, size = 0x12000, scoped, tag = 'internal scratch']
  #allocation2 [shape = 'f32[8,52]{1,0:T(8,128)}', space=vmem, size = 0x1000, scoped, tag = 'scratch operand']
  #allocation3 [shape = 's32[1]{0}', space=sflag, size = 0x4, scoped, tag = 'scoped memory for tpu_custom_call.1']
  #allocation4 [shape = 'u8[4096]{0}', space=smem, size = 0x1000, scoped, tag = 'prefetched SMEM operand 0']
  %s0 = inlined_call_operand.vmem [shape: s32[8,3], index: 0, kind: input, shape index: {}]
  %s1 = inlined_call_operand.vmem [shape: f32[100,18], index: 1, kind: input, shape index: {}]
  %s2 = inlined_call_operand.vmem [shape: f32[50,15], index: 2, kind: input, shape index: {}]
  %s3 = inlined_call_operand.vmem [shape: f32[30,14], index: 3, kind: input, shape index: {}]
  %s4 = inlined_call_operand.vmem [shape: f32[8,5], index: 4, kind: input, shape index: {}]
  %s5 = inlined_call_operand.vmem [shape: f32[3,52], index: 5, kind: input, shape index: {}]
  %s6 = inlined_call_operand.vmem [shape: f32[3,52], index: 6, kind: input, shape index: {}]
  %s7 = inlined_call_operand.vmem [shape: f32[52,32], index: 7, kind: input, shape index: {}]
  %s8 = inlined_call_operand.vmem [shape: f32[1,32], index: 8, kind: input, shape index: {}]
  %s9 = inlined_call_operand.vmem [shape: f32[32,16], index: 9, kind: input, shape index: {}]
  %s10 = inlined_call_operand.vmem [shape: f32[1,16], index: 10, kind: input, shape index: {}]
  %s11 = inlined_call_operand.vmem [shape: f32[1,52], index: 11, kind: input, shape index: {}]
  %s12 = inlined_call_operand.vmem [shape: f32[1,16], index: 12, kind: input, shape index: {}]
  %s13 = inlined_call_operand.hbm [shape: f32[1,8], index: 13, kind: output, shape index: {}]
  %s14 = sld [smem:[#allocation0]]
  $region58: #{tpu_custom_call.1} parent=0
    _
  %s16 = ssub.s32 1, %s14
  %s17 = scalar_select 0, %s16, %s14
  %s18 = sshll.u32 %s0, 4
  %s19 = int_to_ptr.vmem [resolvable:$true] %s18
  %21 = dma.vmem_to_smem %s19, 128, [#allocation4], [#allocation3]
  %22 = dma.done [#allocation3], 128
  %23 = sfence
  $region1: #{tpu_custom_call.1} parent=0
    #allocation5 [shape = 'u8[512]{0}', space=vmem, size = 0x400, scoped, tag = 'output window, operand 0, single buffered']
    #allocation6 [shape = 's32[1]{0}', space=sflag, size = 0x4, scoped, tag = 'scoped memory for tpu_custom_call.1']
    %24 = vsyncpa [#allocation6], 0
    // Predicated region
    $region2: #{tpu_custom_call.1} parent=1 // pred_check
      _
    $region3: #{tpu_custom_call.1} parent=1 // pred_check_branch
      %26 = sbr.rel (0) target = $region5
    $region4: #{tpu_custom_call.1} parent=1 // pred_region
      _
    $region5: #{tpu_custom_call.1} parent=1 // pred_fallthru
      _
    // Predicated region
    $region6: #{tpu_custom_call.1} parent=1 // pred_check
      _
    $region7: #{tpu_custom_call.1} parent=1 // pred_check_branch
      %28 = sbr.rel (0) target = $region9
    $region8: #{tpu_custom_call.1} parent=1 // pred_region
      _
    $region9: #{tpu_custom_call.1} parent=1 // pred_fallthru
      _
    // Predicated region
    $region10: #{tpu_custom_call.1} parent=1 // pred_check
      _
    $region11: #{tpu_custom_call.1} parent=1 // pred_check_branch
      %30 = sbr.rel (0) target = $region13
    $region12: #{tpu_custom_call.1} parent=1 // pred_region
      _
    $region13: #{tpu_custom_call.1} parent=1 // pred_fallthru
      _
    // Predicated region
    $region14: #{tpu_custom_call.1} parent=1 // pred_check
      _
    $region15: #{tpu_custom_call.1} parent=1 // pred_check_branch
      %32 = sbr.rel (0) target = $region17
    $region16: #{tpu_custom_call.1} parent=1 // pred_region
      _
    $region17: #{tpu_custom_call.1} parent=1 // pred_fallthru
      _
    // Predicated region
    $region18: #{tpu_custom_call.1} parent=1 // pred_check
      _
    $region19: #{tpu_custom_call.1} parent=1 // pred_check_branch
      %34 = sbr.rel (0) target = $region21
    $region20: #{tpu_custom_call.1} parent=1 // pred_region
      _
    $region21: #{tpu_custom_call.1} parent=1 // pred_fallthru
      _
    // Predicated region
    $region22: #{tpu_custom_call.1} parent=1 // pred_check
      _
    $region23: #{tpu_custom_call.1} parent=1 // pred_check_branch
      %36 = sbr.rel (0) target = $region25
    $region24: #{tpu_custom_call.1} parent=1 // pred_region
      _
    $region25: #{tpu_custom_call.1} parent=1 // pred_fallthru
      _
    // Predicated region
    $region26: #{tpu_custom_call.1} parent=1 // pred_check
      _
    $region27: #{tpu_custom_call.1} parent=1 // pred_check_branch
      %38 = sbr.rel (0) target = $region29
    $region28: #{tpu_custom_call.1} parent=1 // pred_region
      _
    $region29: #{tpu_custom_call.1} parent=1 // pred_fallthru
      _
    // Predicated region
    $region30: #{tpu_custom_call.1} parent=1 // pred_check
      _
    $region31: #{tpu_custom_call.1} parent=1 // pred_check_branch
      %40 = sbr.rel (0) target = $region33
    $region32: #{tpu_custom_call.1} parent=1 // pred_region
      _
    $region33: #{tpu_custom_call.1} parent=1 // pred_fallthru
      _
    // Predicated region
    $region34: #{tpu_custom_call.1} parent=1 // pred_check
      _
    $region35: #{tpu_custom_call.1} parent=1 // pred_check_branch
      %42 = sbr.rel (0) target = $region37
    $region36: #{tpu_custom_call.1} parent=1 // pred_region
      _
    $region37: #{tpu_custom_call.1} parent=1 // pred_fallthru
      _
    // Predicated region
    $region38: #{tpu_custom_call.1} parent=1 // pred_check
      _
    $region39: #{tpu_custom_call.1} parent=1 // pred_check_branch
      %44 = sbr.rel (0) target = $region41
    $region40: #{tpu_custom_call.1} parent=1 // pred_region
      _
    $region41: #{tpu_custom_call.1} parent=1 // pred_fallthru
      _
    // Predicated region
    $region42: #{tpu_custom_call.1} parent=1 // pred_check
      _
    $region43: #{tpu_custom_call.1} parent=1 // pred_check_branch
      %46 = sbr.rel (0) target = $region45
    $region44: #{tpu_custom_call.1} parent=1 // pred_region
      _
    $region45: #{tpu_custom_call.1} parent=1 // pred_fallthru
      _
    // Predicated region
    $region46: #{tpu_custom_call.1} parent=1 // pred_check
      _
    $region47: #{tpu_custom_call.1} parent=1 // pred_check_branch
      %48 = sbr.rel (0) target = $region49
    $region48: #{tpu_custom_call.1} parent=1 // pred_region
      _
    $region49: #{tpu_custom_call.1} parent=1 // pred_fallthru
      _
    %s49 = sld [smem:[#allocation4]]
    %s50 = scalar_lea.vmem %s1, %s49
    %v51 = vld [vmem:[%s50] sm:$0x1]
    %vm52 = vcmask 139264
    %53 = vst.msk [vmem:[#allocation2] sm:$0x1] %vm52, %v51
    %s54 = sld [smem:[#allocation4 + $0x80]]
    %s55 = scalar_lea.vmem %s1, %s54
    %v56 = vld [vmem:[%s55] sm:$0x1]
    %57 = vst.msk [vmem:[#allocation2 + $0x1] sm:$0x1] %vm52, %v56
    %s58 = sld [smem:[#allocation4 + $0x100]]
    %s59 = scalar_lea.vmem %s1, %s58
    %v60 = vld [vmem:[%s59] sm:$0x1]
    %61 = vst.msk [vmem:[#allocation2 + $0x2] sm:$0x1] %vm52, %v60
    %s62 = sld [smem:[#allocation4 + $0x180]]
    %s63 = scalar_lea.vmem %s1, %s62
    %v64 = vld [vmem:[%s63] sm:$0x1]
    %65 = vst.msk [vmem:[#allocation2 + $0x3] sm:$0x1] %vm52, %v64
    %s66 = sld [smem:[#allocation4 + $0x200]]
    %s67 = scalar_lea.vmem %s1, %s66
    %v68 = vld [vmem:[%s67] sm:$0x1]
    %69 = vst.msk [vmem:[#allocation2 + $0x4] sm:$0x1] %vm52, %v68
    %s70 = sld [smem:[#allocation4 + $0x280]]
    %s71 = scalar_lea.vmem %s1, %s70
    %v72 = vld [vmem:[%s71] sm:$0x1]
    %73 = vst.msk [vmem:[#allocation2 + $0x5] sm:$0x1] %vm52, %v72
    %s74 = sld [smem:[#allocation4 + $0x300]]
    %s75 = scalar_lea.vmem %s1, %s74
    %v76 = vld [vmem:[%s75] sm:$0x1]
    %77 = vst.msk [vmem:[#allocation2 + $0x6] sm:$0x1] %vm52, %v76
    %s78 = sld [smem:[#allocation4 + $0x380]]
    %s79 = scalar_lea.vmem %s1, %s78
    %v80 = vld [vmem:[%s79] sm:$0x1]
    %81 = vst.msk [vmem:[#allocation2 + $0x7] sm:$0x1] %vm52, %v80
    %s82 = sld [smem:[#allocation4 + $0x1]]
    %s83 = scalar_lea.vmem %s2, %s82
    %v84 = vld [vmem:[%s83] sm:$0x1]
    %86 = vrot.lane.b32.xlu0 %v84, 18
    %v87 = vpop.permute.xlu0 %86
    %vm89 = vcmask 262288
    %90 = vst.msk [vmem:[#allocation2] sm:$0x1] %vm89, %v87
    %s91 = sld [smem:[#allocation4 + $0x81]]
    %s92 = scalar_lea.vmem %s2, %s91
    %v93 = vld [vmem:[%s92] sm:$0x1]
    %95 = vrot.lane.b32.xlu0 %v93, 18
    %v96 = vpop.permute.xlu0 %95
    %98 = vst.msk [vmem:[#allocation2 + $0x1] sm:$0x1] %vm89, %v96
    %s99 = sld [smem:[#allocation4 + $0x101]]
    %s100 = scalar_lea.vmem %s2, %s99
    %v101 = vld [vmem:[%s100] sm:$0x1]
    %103 = vrot.lane.b32.xlu0 %v101, 18
    %v104 = vpop.permute.xlu0 %103
    %106 = vst.msk [vmem:[#allocation2 + $0x2] sm:$0x1] %vm89, %v104
    %s107 = sld [smem:[#allocation4 + $0x181]]
    %s108 = scalar_lea.vmem %s2, %s107
    %v109 = vld [vmem:[%s108] sm:$0x1]
    %111 = vrot.lane.b32.xlu0 %v109, 18
    %v112 = vpop.permute.xlu0 %111
    %114 = vst.msk [vmem:[#allocation2 + $0x3] sm:$0x1] %vm89, %v112
    %s115 = sld [smem:[#allocation4 + $0x201]]
    %s116 = scalar_lea.vmem %s2, %s115
    %v117 = vld [vmem:[%s116] sm:$0x1]
    %119 = vrot.lane.b32.xlu0 %v117, 18
    %v120 = vpop.permute.xlu0 %119
    %122 = vst.msk [vmem:[#allocation2 + $0x4] sm:$0x1] %vm89, %v120
    %s123 = sld [smem:[#allocation4 + $0x281]]
    %s124 = scalar_lea.vmem %s2, %s123
    %v125 = vld [vmem:[%s124] sm:$0x1]
    %127 = vrot.lane.b32.xlu0 %v125, 18
    %v128 = vpop.permute.xlu0 %127
    %130 = vst.msk [vmem:[#allocation2 + $0x5] sm:$0x1] %vm89, %v128
    %s131 = sld [smem:[#allocation4 + $0x301]]
    %s132 = scalar_lea.vmem %s2, %s131
    %v133 = vld [vmem:[%s132] sm:$0x1]
    %135 = vrot.lane.b32.xlu0 %v133, 18
    %v136 = vpop.permute.xlu0 %135
    %138 = vst.msk [vmem:[#allocation2 + $0x6] sm:$0x1] %vm89, %v136
    %s139 = sld [smem:[#allocation4 + $0x381]]
    %s140 = scalar_lea.vmem %s2, %s139
    %v141 = vld [vmem:[%s140] sm:$0x1]
    %143 = vrot.lane.b32.xlu0 %v141, 18
    %v144 = vpop.permute.xlu0 %143
    %146 = vst.msk [vmem:[#allocation2 + $0x7] sm:$0x1] %vm89, %v144
    %s147 = sld [smem:[#allocation4 + $0x2]]
    %s148 = scalar_lea.vmem %s3, %s147
    %v149 = vld [vmem:[%s148] sm:$0x1]
    %151 = vrot.lane.b32.xlu0 %v149, 33
    %v152 = vpop.permute.xlu0 %151
    %vm154 = vcmask 377096
    %155 = vst.msk [vmem:[#allocation2] sm:$0x1] %vm154, %v152
    %s156 = sld [smem:[#allocation4 + $0x82]]
    %s157 = scalar_lea.vmem %s3, %s156
    %v158 = vld [vmem:[%s157] sm:$0x1]
    %160 = vrot.lane.b32.xlu0 %v158, 33
    %v161 = vpop.permute.xlu0 %160
    %163 = vst.msk [vmem:[#allocation2 + $0x1] sm:$0x1] %vm154, %v161
    %s164 = sld [smem:[#allocation4 + $0x102]]
    %s165 = scalar_lea.vmem %s3, %s164
    %v166 = vld [vmem:[%s165] sm:$0x1]
    %168 = vrot.lane.b32.xlu0 %v166, 33
    %v169 = vpop.permute.xlu0 %168
    %171 = vst.msk [vmem:[#allocation2 + $0x2] sm:$0x1] %vm154, %v169
    %s172 = sld [smem:[#allocation4 + $0x182]]
    %s173 = scalar_lea.vmem %s3, %s172
    %v174 = vld [vmem:[%s173] sm:$0x1]
    %176 = vrot.lane.b32.xlu0 %v174, 33
    %v177 = vpop.permute.xlu0 %176
    %179 = vst.msk [vmem:[#allocation2 + $0x3] sm:$0x1] %vm154, %v177
    %s180 = sld [smem:[#allocation4 + $0x202]]
    %s181 = scalar_lea.vmem %s3, %s180
    %v182 = vld [vmem:[%s181] sm:$0x1]
    %184 = vrot.lane.b32.xlu0 %v182, 33
    %v185 = vpop.permute.xlu0 %184
    %187 = vst.msk [vmem:[#allocation2 + $0x4] sm:$0x1] %vm154, %v185
    %s188 = sld [smem:[#allocation4 + $0x282]]
    %s189 = scalar_lea.vmem %s3, %s188
    %v190 = vld [vmem:[%s189] sm:$0x1]
    %192 = vrot.lane.b32.xlu0 %v190, 33
    %v193 = vpop.permute.xlu0 %192
    %195 = vst.msk [vmem:[#allocation2 + $0x5] sm:$0x1] %vm154, %v193
    %s196 = sld [smem:[#allocation4 + $0x302]]
    %s197 = scalar_lea.vmem %s3, %s196
    %v198 = vld [vmem:[%s197] sm:$0x1]
    %200 = vrot.lane.b32.xlu0 %v198, 33
    %v201 = vpop.permute.xlu0 %200
    %203 = vst.msk [vmem:[#allocation2 + $0x6] sm:$0x1] %vm154, %v201
    %s204 = sld [smem:[#allocation4 + $0x382]]
    %s205 = scalar_lea.vmem %s3, %s204
    %v206 = vld [vmem:[%s205] sm:$0x1]
    %208 = vrot.lane.b32.xlu0 %v206, 33
    %v209 = vpop.permute.xlu0 %208
    %211 = vst.msk [vmem:[#allocation2 + $0x7] sm:$0x1] %vm154, %v209
    %v212 = vld [vmem:[%s4] sm:$0xff]
    %214 = vrot.lane.b32.xlu0 %v212, 47
    %v215 = vpop.permute.xlu0 %214
    %vm217 = vcmask 425336
    %218 = vst.msk [vmem:[#allocation2] sm:$0xff] %vm217, %v215
    %v219 = vld [vmem:[#allocation2] sm:$0xff]
    %vm220 = vcmask 424960
    %v221 = vsel %vm220, %v219, 0.0
    %v222 = vrot.slane %v221, 4
    %v223 = vadd.f32 %v221, %v222
    %v224 = vrot.slane %v223, 2
    %v225 = vadd.f32 %v223, %v224
    %v226 = vrot.slane %v225, 1
    %v227 = vadd.f32 %v225, %v226
    %v228 = vrcp.pop 8.0
    %v229 = vmul.f32 %v227, %v228
    %v230 = vsub.f32 %v219, %v229
    %v231 = vmul.f32 %v230, %v230
    %v232 = vsel %vm220, %v231, 0.0
    %v233 = vrot.slane %v232, 4
    %v234 = vadd.f32 %v232, %v233
    %v235 = vrot.slane %v234, 2
    %v236 = vadd.f32 %v234, %v235
    %v237 = vrot.slane %v236, 1
    %v238 = vadd.f32 %v236, %v237
    %v239 = vmul.f32 %v238, %v228
    %v240 = vadd.f32 %v239, 1e-05
    %v241 = vrsqrt.pop %v240
    %v242 = vmul.f32 %v230, %v241
    %v243 = vld [vmem:[%s5] sm:$0x7]
    %v244 = vld [vmem:[%s6] sm:$0x7]
    %v245 = vlaneseq
    %v246 = vshrl.u32 %v245, 7
    %v247 = vsub.s32 0, %v246
    %v248 = vrot.slane %v243, %v247
    %v249 = vmul.f32 %v242, %v248
    %v250 = vsel %vm220, %v249, 0.0
    %251 = vadd.xlane.f32.xlu0 %v250
    %v252 = vpop.xlane.xlu0 %251
    %v253 = vmul.f32 %v242, %v252
    %v254 = vlaneseq
    %v255 = vshrl.u32 %v254, 7
    %v256 = vsub.s32 0, %v255
    %v257 = vrot.slane %v244, %v256
    %v258 = vadd.f32 %v253, %v257
    %v259 = vadd.f32 %v258, %v242
    %v260 = vlaneseq
    %v261 = vshrl.u32 %v260, 7
    %v262 = vsub.s32 1, %v261
    %v263 = vrot.slane %v243, %v262
    %v264 = vmul.f32 %v259, %v263
    %v265 = vsel %vm220, %v264, 0.0
    %266 = vadd.xlane.f32.xlu0 %v265
    %v267 = vpop.xlane.xlu0 %266
    %v268 = vmul.f32 %v242, %v267
    %v269 = vlaneseq
    %v270 = vshrl.u32 %v269, 7
    %v271 = vsub.s32 1, %v270
    %v272 = vrot.slane %v244, %v271
    %v273 = vadd.f32 %v268, %v272
    %v274 = vadd.f32 %v273, %v259
    %v275 = vlaneseq
    %v276 = vshrl.u32 %v275, 7
    %v277 = vsub.s32 2, %v276
    %v278 = vrot.slane %v243, %v277
    %v279 = vmul.f32 %v274, %v278
    %v280 = vsel %vm220, %v279, 0.0
    %281 = vadd.xlane.f32.xlu0 %v280
    %v282 = vpop.xlane.xlu0 %281
    %v283 = vmul.f32 %v242, %v282
    %v284 = vlaneseq
    %v285 = vshrl.u32 %v284, 7
    %v286 = vsub.s32 2, %v285
    %v287 = vrot.slane %v244, %v286
    %v288 = vadd.f32 %v283, %v287
    %v289 = vadd.f32 %v288, %v274
    %v290 = vld [vmem:[%s7] sm:$0xff]
    %v291 = vld [vmem:[%s7 + $0x8] sm:$0xff]
    %v292 = vld [vmem:[%s7 + $0x10] sm:$0xff]
    %v293 = vld [vmem:[%s7 + $0x18] sm:$0xff]
    %v294 = vld [vmem:[%s7 + $0x20] sm:$0xff]
    %v295 = vld [vmem:[%s7 + $0x28] sm:$0xff]
    %v296 = vld [vmem:[%s7 + $0x30] sm:$0xf]
    %v297 = vld [vmem:[%s8] sm:$0x1]
    %v299 = vlaneseq
    %v300 = vshrl.u32 %v299, 7
    %v301 = vsub.s32 0, %v300
    %v302 = vrot.slane %v297, %v301
    %v305 = vsel %vm220, %v242, 0
    %vm307 = vcmask 1043456
    %v309 = vsel %vm307, %v296, 0
    %311 = vmatprep.subr.mxu0 0.0
    %312 = vmatpush1.msra.mxu0 %v290
    %313 = vmatprep.subr.mxu0 0.0
    %314 = vmatpush1.msra.mxu0 %v291
    %315 = vmatprep.subr.mxu0 0.0
    %316 = vmatpush1.msra.mxu0 %v292
    %317 = vmatprep.subr.mxu0 0.0
    %318 = vmatpush1.msra.mxu0 %v293
    %319 = vmatprep.subr.mxu0 0.0
    %320 = vmatpush1.msra.mxu0 %v294
    %321 = vmatprep.subr.mxu0 0.0
    %322 = vmatpush1.msra.mxu0 %v295
    %323 = vmatprep.subr.mxu0 0.0
    %324 = vmatpush1.msra.mxu0 %v309
    %325 = vmatprep.subr.mxu0 0.0
    %326 = vmatpush1.msra.mxu0 0.0
    %327 = vmatprep.subr.mxu0 0.0
    %328 = vmatpush1.msra.mxu0 0.0
    %329 = vmatprep.subr.mxu0 0.0
    %330 = vmatpush1.msra.mxu0 0.0
    %331 = vmatprep.subr.mxu0 0.0
    %332 = vmatpush1.msra.mxu0 0.0
    %333 = vmatprep.subr.mxu0 0.0
    %334 = vmatpush1.msra.mxu0 0.0
    %335 = vmatprep.subr.mxu0 0.0
    %336 = vmatpush1.msra.mxu0 0.0
    %337 = vmatprep.subr.mxu0 0.0
    %338 = vmatpush1.msra.mxu0 0.0
    %339 = vmatprep.subr.mxu0 0.0
    %340 = vmatpush1.msra.mxu0 0.0
    %341 = vmatprep.subr.mxu0 0.0
    %342 = vmatpush1.msra.mxu0 0.0
    %343 = vmatprep.subr.mxu0 0.0
    %344 = vmatpush1.msra.mxu0 0.0
    %345 = vmatprep.subr.mxu0 0.0
    %346 = vmatpush1.msra.mxu0 0.0
    %347 = vmatprep.subr.mxu0 0.0
    %348 = vmatpush1.msra.mxu0 0.0
    %349 = vmatprep.subr.mxu0 0.0
    %350 = vmatpush1.msra.mxu0 0.0
    %351 = vmatprep.subr.mxu0 0.0
    %352 = vmatpush1.msra.mxu0 0.0
    %353 = vmatprep.subr.mxu0 0.0
    %354 = vmatpush1.msra.mxu0 0.0
    %355 = vmatprep.subr.mxu0 0.0
    %356 = vmatpush1.msra.mxu0 0.0
    %357 = vmatprep.subr.mxu0 0.0
    %358 = vmatpush1.msra.mxu0 0.0
    %359 = vmatprep.subr.mxu0 0.0
    %360 = vmatpush1.msra.mxu0 0.0
    %361 = vmatprep.subr.mxu0 0.0
    %362 = vmatpush1.msra.mxu0 0.0
    %363 = vmatprep.subr.mxu0 0.0
    %364 = vmatpush1.msra.mxu0 0.0
    %365 = vmatprep.subr.mxu0 0.0
    %366 = vmatpush1.msra.mxu0 0.0
    %367 = vmatprep.subr.mxu0 0.0
    %368 = vmatpush1.msra.mxu0 0.0
    %369 = vmatprep.subr.mxu0 0.0
    %370 = vmatpush1.msra.mxu0 0.0
    %371 = vmatprep.subr.mxu0 0.0
    %372 = vmatpush1.msra.mxu0 0.0
    %373 = vmatprep.subr.mxu0 0.0
    %374 = vmatpush1.msra.mxu0 0.0
    %375 = vmatprep.mubr.f32.mxu0 0.0
    %376 = vmatmul.mubr.f32.gmra.mrb[0].mxu0 %v305
    %v377 = vpop.f32.mrb[0].mxu0
    %v378 = vadd.f32 %v302, %v377
    %v379 = vpop.f32.mrb[0].mxu0
    %380 = vdwg.mxu0
    %vm381 = vcmask 261120
    %v382 = vsel %vm381, %v378, 0.0
    %v383 = vrot.slane %v382, 4
    %v384 = vadd.f32 %v382, %v383
    %v385 = vrot.slane %v384, 2
    %v386 = vadd.f32 %v384, %v385
    %v387 = vrot.slane %v386, 1
    %v388 = vadd.f32 %v386, %v387
    %v389 = vmul.f32 %v388, %v228
    %v390 = vsub.f32 %v378, %v389
    %v391 = vmul.f32 %v390, %v390
    %v392 = vsel %vm381, %v391, 0.0
    %v393 = vrot.slane %v392, 4
    %v394 = vadd.f32 %v392, %v393
    %v395 = vrot.slane %v394, 2
    %v396 = vadd.f32 %v394, %v395
    %v397 = vrot.slane %v396, 1
    %v398 = vadd.f32 %v396, %v397
    %v399 = vmul.f32 %v398, %v228
    %v400 = vadd.f32 %v399, 1e-05
    %v401 = vrsqrt.pop %v400
    %v402 = vmul.f32 %v390, %v401
    %v403 = vmax.f32 %v402, 0.0
    %v404 = vld [vmem:[%s9] sm:$0xff]
    %v405 = vld [vmem:[%s9 + $0x8] sm:$0xff]
    %v406 = vld [vmem:[%s9 + $0x10] sm:$0xff]
    %v407 = vld [vmem:[%s9 + $0x18] sm:$0xff]
    %v408 = vld [vmem:[%s10] sm:$0x1]
    %v410 = vlaneseq
    %v411 = vshrl.u32 %v410, 7
    %v412 = vsub.s32 0, %v411
    %v413 = vrot.slane %v408, %v412
    %v416 = vsel %vm381, %v403, 0
    %418 = vmatprep.subr.mxu0 0.0
    %419 = vmatpush1.msra.mxu0 %v404
    %420 = vmatprep.subr.mxu0 0.0
    %421 = vmatpush1.msra.mxu0 %v405
    %422 = vmatprep.subr.mxu0 0.0
    %423 = vmatpush1.msra.mxu0 %v406
    %424 = vmatprep.subr.mxu0 0.0
    %425 = vmatpush1.msra.mxu0 %v407
    %426 = vmatprep.subr.mxu0 0.0
    %427 = vmatpush1.msra.mxu0 0.0
    %428 = vmatprep.subr.mxu0 0.0
    %429 = vmatpush1.msra.mxu0 0.0
    %430 = vmatprep.subr.mxu0 0.0
    %431 = vmatpush1.msra.mxu0 0.0
    %432 = vmatprep.subr.mxu0 0.0
    %433 = vmatpush1.msra.mxu0 0.0
    %434 = vmatprep.subr.mxu0 0.0
    %435 = vmatpush1.msra.mxu0 0.0
    %436 = vmatprep.subr.mxu0 0.0
    %437 = vmatpush1.msra.mxu0 0.0
    %438 = vmatprep.subr.mxu0 0.0
    %439 = vmatpush1.msra.mxu0 0.0
    %440 = vmatprep.subr.mxu0 0.0
    %441 = vmatpush1.msra.mxu0 0.0
    %442 = vmatprep.subr.mxu0 0.0
    %443 = vmatpush1.msra.mxu0 0.0
    %444 = vmatprep.subr.mxu0 0.0
    %445 = vmatpush1.msra.mxu0 0.0
    %446 = vmatprep.subr.mxu0 0.0
    %447 = vmatpush1.msra.mxu0 0.0
    %448 = vmatprep.subr.mxu0 0.0
    %449 = vmatpush1.msra.mxu0 0.0
    %450 = vmatprep.subr.mxu0 0.0
    %451 = vmatpush1.msra.mxu0 0.0
    %452 = vmatprep.subr.mxu0 0.0
    %453 = vmatpush1.msra.mxu0 0.0
    %454 = vmatprep.subr.mxu0 0.0
    %455 = vmatpush1.msra.mxu0 0.0
    %456 = vmatprep.subr.mxu0 0.0
    %457 = vmatpush1.msra.mxu0 0.0
    %458 = vmatprep.subr.mxu0 0.0
    %459 = vmatpush1.msra.mxu0 0.0
    %460 = vmatprep.subr.mxu0 0.0
    %461 = vmatpush1.msra.mxu0 0.0
    %462 = vmatprep.subr.mxu0 0.0
    %463 = vmatpush1.msra.mxu0 0.0
    %464 = vmatprep.subr.mxu0 0.0
    %465 = vmatpush1.msra.mxu0 0.0
    %466 = vmatprep.subr.mxu0 0.0
    %467 = vmatpush1.msra.mxu0 0.0
    %468 = vmatprep.subr.mxu0 0.0
    %469 = vmatpush1.msra.mxu0 0.0
    %470 = vmatprep.subr.mxu0 0.0
    %471 = vmatpush1.msra.mxu0 0.0
    %472 = vmatprep.subr.mxu0 0.0
    %473 = vmatpush1.msra.mxu0 0.0
    %474 = vmatprep.subr.mxu0 0.0
    %475 = vmatpush1.msra.mxu0 0.0
    %476 = vmatprep.subr.mxu0 0.0
    %477 = vmatpush1.msra.mxu0 0.0
    %478 = vmatprep.subr.mxu0 0.0
    %479 = vmatpush1.msra.mxu0 0.0
    %480 = vmatprep.subr.mxu0 0.0
    %481 = vmatpush1.msra.mxu0 0.0
    %482 = vmatprep.mubr.f32.mxu0 0.0
    %483 = vmatmul.mubr.f32.gmra.mrb[0].mxu0 %v416
    %v484 = vpop.f32.mrb[0].mxu0
    %v485 = vadd.f32 %v413, %v484
    %v486 = vpop.f32.mrb[0].mxu0
    %487 = vdwg.mxu0
    %vm488 = vcmask 130048
    %v489 = vsel %vm488, %v485, 0.0
    %v490 = vrot.slane %v489, 4
    %v491 = vadd.f32 %v489, %v490
    %v492 = vrot.slane %v491, 2
    %v493 = vadd.f32 %v491, %v492
    %v494 = vrot.slane %v493, 1
    %v495 = vadd.f32 %v493, %v494
    %v496 = vmul.f32 %v495, %v228
    %v497 = vsub.f32 %v485, %v496
    %v498 = vmul.f32 %v497, %v497
    %v499 = vsel %vm488, %v498, 0.0
    %v500 = vrot.slane %v499, 4
    %v501 = vadd.f32 %v499, %v500
    %v502 = vrot.slane %v501, 2
    %v503 = vadd.f32 %v501, %v502
    %v504 = vrot.slane %v503, 1
    %v505 = vadd.f32 %v503, %v504
    %v506 = vmul.f32 %v505, %v228
    %v507 = vadd.f32 %v506, 1e-05
    %v508 = vrsqrt.pop %v507
    %v509 = vmul.f32 %v497, %v508
    %v510 = vmax.f32 %v509, 0.0
    %v511 = vld [vmem:[%s11] sm:$0x1]
    %v512 = vld [vmem:[%s12] sm:$0x1]
    %v514 = vsel %vm488, %v512, 0
    %v517 = vsel %vm488, %v510, 0
    %519 = vmatprep.subr.mxu0 0.0
    %520 = vmatpush1.xpose.msra.mxu0 %v517
    %521 = vmatprep.subr.mxu0 0.0
    %522 = vmatpush1.xpose.msra.mxu0 0.0
    %523 = vmatprep.subr.mxu0 0.0
    %524 = vmatpush1.xpose.msra.mxu0 0.0
    %525 = vmatprep.subr.mxu0 0.0
    %526 = vmatpush1.xpose.msra.mxu0 0.0
    %527 = vmatprep.subr.mxu0 0.0
    %528 = vmatpush1.xpose.msra.mxu0 0.0
    %529 = vmatprep.subr.mxu0 0.0
    %530 = vmatpush1.xpose.msra.mxu0 0.0
    %531 = vmatprep.subr.mxu0 0.0
    %532 = vmatpush1.xpose.msra.mxu0 0.0
    %533 = vmatprep.subr.mxu0 0.0
    %534 = vmatpush1.xpose.msra.mxu0 0.0
    %535 = vmatprep.subr.mxu0 0.0
    %536 = vmatpush1.xpose.msra.mxu0 0.0
    %537 = vmatprep.subr.mxu0 0.0
    %538 = vmatpush1.xpose.msra.mxu0 0.0
    %539 = vmatprep.subr.mxu0 0.0
    %540 = vmatpush1.xpose.msra.mxu0 0.0
    %541 = vmatprep.subr.mxu0 0.0
    %542 = vmatpush1.xpose.msra.mxu0 0.0
    %543 = vmatprep.subr.mxu0 0.0
    %544 = vmatpush1.xpose.msra.mxu0 0.0
    %545 = vmatprep.subr.mxu0 0.0
    %546 = vmatpush1.xpose.msra.mxu0 0.0
    %547 = vmatprep.subr.mxu0 0.0
    %548 = vmatpush1.xpose.msra.mxu0 0.0
    %549 = vmatprep.subr.mxu0 0.0
    %550 = vmatpush1.xpose.msra.mxu0 0.0
    %551 = vmatprep.subr.mxu0 0.0
    %552 = vmatpush1.xpose.msra.mxu0 0.0
    %553 = vmatprep.subr.mxu0 0.0
    %554 = vmatpush1.xpose.msra.mxu0 0.0
    %555 = vmatprep.subr.mxu0 0.0
    %556 = vmatpush1.xpose.msra.mxu0 0.0
    %557 = vmatprep.subr.mxu0 0.0
    %558 = vmatpush1.xpose.msra.mxu0 0.0
    %559 = vmatprep.subr.mxu0 0.0
    %560 = vmatpush1.xpose.msra.mxu0 0.0
    %561 = vmatprep.subr.mxu0 0.0
    %562 = vmatpush1.xpose.msra.mxu0 0.0
    %563 = vmatprep.subr.mxu0 0.0
    %564 = vmatpush1.xpose.msra.mxu0 0.0
    %565 = vmatprep.subr.mxu0 0.0
    %566 = vmatpush1.xpose.msra.mxu0 0.0
    %567 = vmatprep.subr.mxu0 0.0
    %568 = vmatpush1.xpose.msra.mxu0 0.0
    %569 = vmatprep.subr.mxu0 0.0
    %570 = vmatpush1.xpose.msra.mxu0 0.0
    %571 = vmatprep.subr.mxu0 0.0
    %572 = vmatpush1.xpose.msra.mxu0 0.0
    %573 = vmatprep.subr.mxu0 0.0
    %574 = vmatpush1.xpose.msra.mxu0 0.0
    %575 = vmatprep.subr.mxu0 0.0
    %576 = vmatpush1.xpose.msra.mxu0 0.0
    %577 = vmatprep.subr.mxu0 0.0
    %578 = vmatpush1.xpose.msra.mxu0 0.0
    %579 = vmatprep.subr.mxu0 0.0
    %580 = vmatpush1.xpose.msra.mxu0 0.0
    %581 = vmatprep.subr.mxu0 0.0
    %582 = vmatpush1.xpose.msra.mxu0 0.0
    %583 = vmatprep.mubr.f32.mxu0 0.0
    %584 = vmatmul.mubr.f32.gmra.mrb[0].mxu0 %v514
    %v585 = vpop.f32.mrb[0].mxu0
    %v586 = vadd.f32 0.0, %v585
    %v587 = vpop.f32.mrb[0].mxu0
    %588 = vdwg.mxu0
    %v590 = vsel %vm220, %v511, 0
    %v593 = vsel %vm220, %v289, 0
    %595 = vmatprep.subr.mxu0 0.0
    %596 = vmatpush1.xpose.msra.mxu0 %v593
    %597 = vmatprep.subr.mxu0 0.0
    %598 = vmatpush1.xpose.msra.mxu0 0.0
    %599 = vmatprep.subr.mxu0 0.0
    %600 = vmatpush1.xpose.msra.mxu0 0.0
    %601 = vmatprep.subr.mxu0 0.0
    %602 = vmatpush1.xpose.msra.mxu0 0.0
    %603 = vmatprep.subr.mxu0 0.0
    %604 = vmatpush1.xpose.msra.mxu0 0.0
    %605 = vmatprep.subr.mxu0 0.0
    %606 = vmatpush1.xpose.msra.mxu0 0.0
    %607 = vmatprep.subr.mxu0 0.0
    %608 = vmatpush1.xpose.msra.mxu0 0.0
    %609 = vmatprep.subr.mxu0 0.0
    %610 = vmatpush1.xpose.msra.mxu0 0.0
    %611 = vmatprep.subr.mxu0 0.0
    %612 = vmatpush1.xpose.msra.mxu0 0.0
    %613 = vmatprep.subr.mxu0 0.0
    %614 = vmatpush1.xpose.msra.mxu0 0.0
    %615 = vmatprep.subr.mxu0 0.0
    %616 = vmatpush1.xpose.msra.mxu0 0.0
    %617 = vmatprep.subr.mxu0 0.0
    %618 = vmatpush1.xpose.msra.mxu0 0.0
    %619 = vmatprep.subr.mxu0 0.0
    %620 = vmatpush1.xpose.msra.mxu0 0.0
    %621 = vmatprep.subr.mxu0 0.0
    %622 = vmatpush1.xpose.msra.mxu0 0.0
    %623 = vmatprep.subr.mxu0 0.0
    %624 = vmatpush1.xpose.msra.mxu0 0.0
    %625 = vmatprep.subr.mxu0 0.0
    %626 = vmatpush1.xpose.msra.mxu0 0.0
    %627 = vmatprep.subr.mxu0 0.0
    %628 = vmatpush1.xpose.msra.mxu0 0.0
    %629 = vmatprep.subr.mxu0 0.0
    %630 = vmatpush1.xpose.msra.mxu0 0.0
    %631 = vmatprep.subr.mxu0 0.0
    %632 = vmatpush1.xpose.msra.mxu0 0.0
    %633 = vmatprep.subr.mxu0 0.0
    %634 = vmatpush1.xpose.msra.mxu0 0.0
    %635 = vmatprep.subr.mxu0 0.0
    %636 = vmatpush1.xpose.msra.mxu0 0.0
    %637 = vmatprep.subr.mxu0 0.0
    %638 = vmatpush1.xpose.msra.mxu0 0.0
    %639 = vmatprep.subr.mxu0 0.0
    %640 = vmatpush1.xpose.msra.mxu0 0.0
    %641 = vmatprep.subr.mxu0 0.0
    %642 = vmatpush1.xpose.msra.mxu0 0.0
    %643 = vmatprep.subr.mxu0 0.0
    %644 = vmatpush1.xpose.msra.mxu0 0.0
    %645 = vmatprep.subr.mxu0 0.0
    %646 = vmatpush1.xpose.msra.mxu0 0.0
    %647 = vmatprep.subr.mxu0 0.0
    %648 = vmatpush1.xpose.msra.mxu0 0.0
    %649 = vmatprep.subr.mxu0 0.0
    %650 = vmatpush1.xpose.msra.mxu0 0.0
    %651 = vmatprep.subr.mxu0 0.0
    %652 = vmatpush1.xpose.msra.mxu0 0.0
    %653 = vmatprep.subr.mxu0 0.0
    %654 = vmatpush1.xpose.msra.mxu0 0.0
    %655 = vmatprep.subr.mxu0 0.0
    %656 = vmatpush1.xpose.msra.mxu0 0.0
    %657 = vmatprep.subr.mxu0 0.0
    %658 = vmatpush1.xpose.msra.mxu0 0.0
    %659 = vmatprep.mubr.f32.mxu0 0.0
    %660 = vmatmul.mubr.f32.gmra.mrb[0].mxu0 %v590
    %v661 = vpop.f32.mrb[0].mxu0
    %v662 = vadd.f32 %v586, %v661
    %v663 = vpop.f32.mrb[0].mxu0
    %664 = vdwg.mxu0
    %v665 = vxor.u32 %v662, 2147483648
    %v666 = vmul.f32 %v665, 1.442695
    %v667 = vpow.pop %v666
    %v668 = vadd.f32 %v667, 1.0
    %v669 = vrcp.pop %v668
    %v670 = vmul.f32 1.0, %v669
    %vm671 = vcmask 57344
    %672 = vst.msk [vmem:[#allocation5] sm:$0x1] %vm671, %v670
    // Predicated region
    $region50: #{tpu_custom_call.1} parent=1 // pred_check
      _
    $region51: #{tpu_custom_call.1} parent=1 // pred_check_branch
      %674 = sbr.rel (0) target = $region53
    $region52: #{tpu_custom_call.1} parent=1 // pred_region
      %s676 = ssub.s32 16, 16
      %677 = vsyncadd [#allocation6], %s676
      %s679 = sshll.u32 [#allocation5], 4
      %s680 = int_to_ptr.vmem [resolvable:$true] %s679
      %682 = dma.vmem_to_hbm [thread:$0]  %s680, 16, %s13, [#allocation6]
    $region53: #{tpu_custom_call.1} parent=1 // pred_fallthru
      _
    // Predicated region
    $region54: #{tpu_custom_call.1} parent=1 // pred_check
      _
    $region55: #{tpu_custom_call.1} parent=1 // pred_check_branch
      %684 = sbr.rel (0) target = $region57
    $region56: #{tpu_custom_call.1} parent=1 // pred_region
      %685 = dma.done [#allocation6], 16
    $region57: #{tpu_custom_call.1} parent=1 // pred_fallthru
      _
    %686 = vsyncpa [#allocation6], 1

</llo_original>
